<compile_context>
chip_gen: v7x
topology: tpu7x:2x2x1
jax: 0.10.0
libtpu: 0.0.40
codegen_flags: <defaults>
</compile_context>

<pallas_src>
import math

import numpy as np
import jax
import jax.numpy as jnp
from jax.experimental import pallas as pl
from jax.experimental.pallas import tpu as pltpu


def _pe1d_kernel(pos_ref, g_ref, freq_ref, par_ref, o_ref, cache_ref):
    """One (row-tile, batch) grid step.

    pos_ref  : (TR, 1) f32 -- base position of each flattened row (= row * G)
    g_ref    : (1,  W) f32 -- per-lane position offset within a group (j // orig_ch)
    freq_ref : (1,  W) f32 -- per-lane inverse frequency (inv_freq[(j % orig_ch) // 2])
    par_ref  : (1,  W) f32 -- per-lane parity (1.0 -> cos channel, 0.0 -> sin channel)
    o_ref    : (1, TR, W)  -- one batch slice of one row tile of the flattened output
    cache_ref: (TR, W)     -- batch-invariant tile, computed once at b == 0
    """
    b = pl.program_id(1)

    @pl.when(b == 0)
    def _():
        shape = cache_ref.shape
        # pos = row*G + g (exact small integers in f32); arg = pos * inv_freq
        # -- same grouping / single rounding as the PyTorch reference.
        pos = jnp.broadcast_to(pos_ref[...], shape) + jnp.broadcast_to(g_ref[...], shape)
        arg = pos * jnp.broadcast_to(freq_ref[...], shape)
        par = jnp.broadcast_to(par_ref[...], shape)
        val = jnp.where(par != 0.0, jnp.cos(arg), jnp.sin(arg))
        cache_ref[...] = val.astype(cache_ref.dtype)

    # Batch broadcast fused into the kernel: just re-store the cached tile.
    o_ref[0] = cache_ref[...]


def positional_encoding_1d(tensor: jax.Array) -> jax.Array:
    """Pallas equivalent of PositionalEncoding1D(channels=ch).forward(tensor)."""
    if tensor.ndim != 3:
        raise RuntimeError("The input tensor has to be 3d!")
    batch, x, orig_ch = tensor.shape
    out_dtype = tensor.dtype

    # --- buffer setup (mirrors nn.Module.__init__) ---
    channels = int(np.ceil(orig_ch / 2) * 2)
    inv_freq = 1.0 / (
        10000.0 ** (np.arange(0, channels, 2, dtype=np.float32) / np.float32(channels))
    )
    inv_freq = np.asarray(inv_freq, dtype=np.float32)

    # --- lane-dense flattened layout: W = lcm(orig_ch, 128) is always a multiple
    #     of 128 (full unmasked lane stores).  G positions are packed per flattened
    #     row; when x is not a multiple of G we pad rows and slice in the wrapper
    #     (never fall back to narrow masked stores). ---
    G = 128 // math.gcd(orig_ch, 128)
    W = G * orig_ch
    R = -(-x // G)                                     # ceil(x / G), flattened rows

    col = np.arange(W)
    c = col % orig_ch                                  # channel index per lane
    g_lane = (col // orig_ch).astype(np.float32)       # position offset within group
    freq_lane = inv_freq[c // 2].astype(np.float32)
    par_lane = (c % 2).astype(np.float32)               # 1.0 -> cos, 0.0 -> sin
    pos_base = (np.arange(R, dtype=np.float32) * np.float32(G)).reshape(R, 1)

    # --- row tiling: ~2 MiB f32 per output block (already near the HBM roofline);
    #     output double-buffer + cache scratch stays far below default scoped VMEM
    #     on every generation.  Cap TR so the parallel row axis has >= 2 steps when
    #     possible (v7x megacore). ---
    budget_elems = 512 * 1024
    tr_cap = max(8, (budget_elems // W) // 8 * 8)
    if R > 8:
        half = -(-R // 2)
        half = -(-half // 8) * 8
        tr_cap = min(tr_cap, max(8, half))
    TR = R if R <= tr_cap else tr_cap
    grid = (pl.cdiv(R, TR), batch)

    pe_flat = pl.pallas_call(
        _pe1d_kernel,
        out_shape=jax.ShapeDtypeStruct((batch, R, W), out_dtype),
        grid_spec=pltpu.PrefetchScalarGridSpec(
            num_scalar_prefetch=0,
            grid=grid,
            in_specs=[
                pl.BlockSpec((TR, 1), lambda i, b: (i, 0)),   # pos_base (row tile)
                pl.BlockSpec((1, W), lambda i, b: (0, 0)),    # g_lane   (constant)
                pl.BlockSpec((1, W), lambda i, b: (0, 0)),    # freq_lane(constant)
                pl.BlockSpec((1, W), lambda i, b: (0, 0)),    # par_lane (constant)
            ],
            out_specs=pl.BlockSpec((1, TR, W), lambda i, b: (b, i, 0)),
            scratch_shapes=[pltpu.VMEM((TR, W), out_dtype)],
        ),
        compiler_params=pltpu.CompilerParams(
            # Row axis parallel (megacore-shardable); batch axis must stay
            # sequential so the compute-once-at-b==0 cache is valid.
            dimension_semantics=("parallel", "arbitrary"),
            vmem_limit_bytes=48 * 1024 * 1024,
        ),
    )(
        jnp.asarray(pos_base),
        jnp.asarray(g_lane[None, :]),
        jnp.asarray(freq_lane[None, :]),
        jnp.asarray(par_lane[None, :]),
    )

    # Unflatten (batch, R, G*orig_ch) -> (batch, R*G, orig_ch); slice padded rows.
    pe = pe_flat.reshape(batch, R * G, orig_ch)
    if R * G != x:
        pe = pe[:, :x, :]
    # TODO(synk): the module's cached_penc statefulness (skip recompute when the
    # input shape matches the previous call) has no Pallas equivalent; this
    # wrapper is pure/functional.
    return pe


def _reference_numpy(tensor: np.ndarray) -> np.ndarray:
    """Pure-numpy port of the PyTorch forward, for verification."""
    batch, x, orig_ch = tensor.shape
    channels = int(np.ceil(orig_ch / 2) * 2)
    inv_freq = 1.0 / (
        10000.0 ** (np.arange(0, channels, 2, dtype=np.float32) / np.float32(channels))
    )
    pos_x = np.arange(x, dtype=np.float32)
    sin_inp = np.einsum("i,j->ij", pos_x, inv_freq)
    emb_x = np.stack((np.sin(sin_inp), np.cos(sin_inp)), axis=-1).reshape(x, channels)
    emb = np.zeros((x, channels), dtype=np.float32)
    emb[:, :channels] = emb_x
    out = np.broadcast_to(emb[None, :, :orig_ch], (batch, x, orig_ch))
    return out.astype(tensor.dtype).copy()


if __name__ == "__main__":
    key = jax.random.PRNGKey(0)
    batch, x, ch = 2, 8, 32
    tensor = jax.random.normal(key, (batch, x, ch), dtype=jnp.float32)

    out = positional_encoding_1d(tensor)
    out = jax.block_until_ready(out)

    ref = _reference_numpy(np.asarray(tensor))
    assert out.shape == (batch, x, ch)
    np.testing.assert_allclose(np.asarray(out), ref, rtol=1e-5, atol=1e-5)

    print("KERNEL_OK")
</pallas_src>

<mosaic_0001>
module attributes {stable_mosaic.version = 11 : i64} {
  func.func @_pe1d_kernel(%arg0: i32, %arg1: i32, %arg2: memref<2x1xf32, #tpu.memory_space<vmem>>, %arg3: memref<1x128xf32, #tpu.memory_space<vmem>>, %arg4: memref<1x128xf32, #tpu.memory_space<vmem>>, %arg5: memref<1x128xf32, #tpu.memory_space<vmem>>, %arg6: memref<1x2x128xf32, #tpu.memory_space<vmem>>, %arg7: memref<2x128xf32, #tpu.memory_space<vmem>>) attributes {dimension_semantics = [#tpu.dimension_semantics<parallel>, #tpu.dimension_semantics<arbitrary>], iteration_bounds = array<i64: 1, 2>, scalar_prefetch = 0 : i64, scratch_operands = 1 : i64, tpu.core_type = #tpu.core_type<tc>, window_params = [{transform_indices = @transform_0, window_bounds = array<i64: 2, 1>}, {pipeline_mode = #tpu.pipeline_mode<synchronous>, transform_indices = @transform_1, window_bounds = array<i64: 1, 128>}, {pipeline_mode = #tpu.pipeline_mode<synchronous>, transform_indices = @transform_2, window_bounds = array<i64: 1, 128>}, {pipeline_mode = #tpu.pipeline_mode<synchronous>, transform_indices = @transform_3, window_bounds = array<i64: 1, 128>}, {transform_indices = @transform_4, window_bounds = array<i64: 1, 2, 128>}]} {
    %c0_i32 = arith.constant 0 : i32
    %0 = arith.cmpi eq, %arg1, %c0_i32 : i32
    %1 = arith.extui %0 : i1 to i32
    %c0_i32_0 = arith.constant 0 : i32
    %2 = arith.cmpi ne, %1, %c0_i32_0 : i32
    scf.if %2 {
      %c0_5 = arith.constant 0 : index
      %c0_6 = arith.constant 0 : index
      %7 = vector.load %arg2[%c0_5, %c0_6] : memref<2x1xf32, #tpu.memory_space<vmem>>, vector<2x1xf32>
      %8 = vector.shape_cast %7 : vector<2x1xf32> to vector<2x1xf32>
      %9 = vector.broadcast %8 : vector<2x1xf32> to vector<2x128xf32>
      %c0_7 = arith.constant 0 : index
      %c0_8 = arith.constant 0 : index
      %10 = vector.load %arg3[%c0_7, %c0_8] : memref<1x128xf32, #tpu.memory_space<vmem>>, vector<1x128xf32>
      %11 = vector.shape_cast %10 : vector<1x128xf32> to vector<1x128xf32>
      %12 = vector.broadcast %11 : vector<1x128xf32> to vector<2x128xf32>
      %13 = arith.addf %9, %12 : vector<2x128xf32>
      %c0_9 = arith.constant 0 : index
      %c0_10 = arith.constant 0 : index
      %14 = vector.load %arg4[%c0_9, %c0_10] : memref<1x128xf32, #tpu.memory_space<vmem>>, vector<1x128xf32>
      %15 = vector.shape_cast %14 : vector<1x128xf32> to vector<1x128xf32>
      %16 = vector.broadcast %15 : vector<1x128xf32> to vector<2x128xf32>
      %17 = arith.mulf %13, %16 : vector<2x128xf32>
      %c0_11 = arith.constant 0 : index
      %c0_12 = arith.constant 0 : index
      %18 = vector.load %arg5[%c0_11, %c0_12] : memref<1x128xf32, #tpu.memory_space<vmem>>, vector<1x128xf32>
      %19 = vector.shape_cast %18 : vector<1x128xf32> to vector<1x128xf32>
      %20 = vector.broadcast %19 : vector<1x128xf32> to vector<2x128xf32>
      %cst = arith.constant 0.000000e+00 : f32
      %21 = vector.broadcast %cst : f32 to vector<2x128xf32>
      %22 = arith.cmpf one, %20, %21 : vector<2x128xf32>
      %23 = math.cos %17 : vector<2x128xf32>
      %24 = math.sin %17 : vector<2x128xf32>
      %25 = arith.select %22, %23, %24 : vector<2x128xi1>, vector<2x128xf32>
      %c0_13 = arith.constant 0 : index
      %c0_14 = arith.constant 0 : index
      %26 = vector.load %arg7[%c0_13, %c0_14] : memref<2x128xf32, #tpu.memory_space<vmem>>, vector<2x128xf32>
      tpu.vector_store %arg7[%c0_13, %c0_14], %25 {strides = array<i32>} : memref<2x128xf32, #tpu.memory_space<vmem>>, vector<2x128xf32>,
    } else {
    }
    %c0 = arith.constant 0 : index
    %c0_1 = arith.constant 0 : index
    %3 = vector.load %arg7[%c0, %c0_1] : memref<2x128xf32, #tpu.memory_space<vmem>>, vector<2x128xf32>
    %c0_2 = arith.constant 0 : index
    %c0_3 = arith.constant 0 : index
    %c0_4 = arith.constant 0 : index
    %4 = vector.load %arg6[%c0_2, %c0_3, %c0_4] : memref<1x2x128xf32, #tpu.memory_space<vmem>>, vector<1x2x128xf32>
    %5 = vector.shape_cast %4 : vector<1x2x128xf32> to vector<2x128xf32>
    %6 = vector.shape_cast %3 : vector<2x128xf32> to vector<1x2x128xf32>
    tpu.vector_store %arg6[%c0_2, %c0_3, %c0_4], %6 {strides = array<i32>} : memref<1x2x128xf32, #tpu.memory_space<vmem>>, vector<1x2x128xf32>,
    return
  }
  func.func @transform_0(%arg0: i32, %arg1: i32) -> (i32, i32) {
    %c0_i32 = arith.constant 0 : i32
    %c0_i32_0 = arith.constant 0 : i32
    return %arg0, %c0_i32 : i32, i32
  }
  func.func @transform_1(%arg0: i32, %arg1: i32) -> (i32, i32) {
    %c0_i32 = arith.constant 0 : i32
    %c0_i32_0 = arith.constant 0 : i32
    %c0_i32_1 = arith.constant 0 : i32
    return %c0_i32, %c0_i32_0 : i32, i32
  }
  func.func @transform_2(%arg0: i32, %arg1: i32) -> (i32, i32) {
    %c0_i32 = arith.constant 0 : i32
    %c0_i32_0 = arith.constant 0 : i32
    %c0_i32_1 = arith.constant 0 : i32
    return %c0_i32, %c0_i32_0 : i32, i32
  }
  func.func @transform_3(%arg0: i32, %arg1: i32) -> (i32, i32) {
    %c0_i32 = arith.constant 0 : i32
    %c0_i32_0 = arith.constant 0 : i32
    %c0_i32_1 = arith.constant 0 : i32
    return %c0_i32, %c0_i32_0 : i32, i32
  }
  func.func @transform_4(%arg0: i32, %arg1: i32) -> (i32, i32, i32) {
    %c0_i32 = arith.constant 0 : i32
    %c0_i32_0 = arith.constant 0 : i32
    return %arg1, %arg0, %c0_i32 : i32, i32, i32
  }
}

</mosaic_0001>

<llo_original>
// kernel: tpu_custom_call.1
$region0: #{tpu_custom_call.1}
  #allocation0 [shape = 'u32[]', space=smem, size = 0x4, offset = 0x4, fixed_abs, tag = 'smem constant byte address 0x4 - core index']
  #allocation1 [shape = 'u32[144,128]{1,0:T(1,128)}', space=vmem, size = 0x12000, scoped, tag = 'internal scratch']
  #allocation2 [shape = 'f32[2,128]{1,0:T(2,128)}', space=vmem, size = 0x400, scoped, tag = 'scratch operand']
  %s0 = inlined_call_operand.vmem [shape: f32[2,1], index: 0, kind: input, shape index: {}]
  %s1 = inlined_call_operand.vmem [shape: f32[1,128], index: 1, kind: input, shape index: {}]
  %s2 = inlined_call_operand.vmem [shape: f32[1,128], index: 2, kind: input, shape index: {}]
  %s3 = inlined_call_operand.vmem [shape: f32[1,128], index: 3, kind: input, shape index: {}]
  %s4 = inlined_call_operand.hbm [shape: f32[2,2,128], index: 4, kind: output, shape index: {}]
  %s5 = sld [smem:[#allocation0]]
  $region53: #{tpu_custom_call.1} parent=0
    _
  %s7 = ssub.s32 1, %s5
  %s8 = scalar_select 0, %s7, %s5
  $region1: #{tpu_custom_call.1} parent=0
    #allocation3 [shape = 'u8[2048]{0}', space=vmem, size = 0x800, scoped, tag = 'output window, operand 0']
    #allocation4 [shape = 's32[2]{0}', space=sflag, size = 0x8, scoped, tag = 'scoped memory for tpu_custom_call.1']
    %9 = vsyncpa [#allocation4], 0
    %s10 = scalar_lea.sflag [#allocation4], 1
    %11 = vsyncpa %s10, 0
    loop: start=0, step=1, limit=4
    $region2: #{tpu_custom_call.1} parent=1 // loop_pre_header
      _
    $region3: #{tpu_custom_call.1} parent=1 // loop_header
      %s13 = sphi 0, %s17
      %p14 = scmp.ge.s32.totalorder %s13, 4
      %s20 = sphi 0, %s32
      %s21 = sphi 0, %s28
      %s22 = sphi 0, %s20
      %s23 = sphi 0, %s21
      %s24 = sphi 0, %s22
      %s25 = sphi 0, %s23
      %s35 = sphi 0, %s37
      %s38 = sphi 0, %s35
      %s39 = sphi 0, %s38
      %s55 = sphi 0, %s39
      %s59 = sphi 0, %s59
      %s61 = sphi 0, %s59
      %s62 = sphi 0, %s61
      %s76 = sphi 0, %s62
      %s80 = sphi 0, %s80
      %s82 = sphi 0, %s80
      %s83 = sphi 0, %s82
      %s97 = sphi 0, %s83
      %s101 = sphi 0, %s101
      %s103 = sphi 0, %s101
      %s104 = sphi 0, %s103
      %s118 = sphi 0, %s104
      %s126 = sphi 0, %s128
      %s129 = sphi 0, %s126
      %s130 = sphi 0, %s129
      %s146 = sphi 0, %s130
    $region4: #{tpu_custom_call.1} parent=1 // loop_header_branch
      %16 = sbr.rel (%p14) target = $region8
    $region5: #{tpu_custom_call.1} parent=1 // loop_body
      %s18 = ssub.s32 %s13, 1
      %s19 = ssub.s32 %s13, 2
      %s26 = sadd.s32 1, %s21
      %p27 = scmp.ge.s32.totalorder %s26, 2
      %s28 = scalar_select %p27, 0, %s26
      %s29 = sadd.s32 1, %s20
      %s30 = scalar_select %p27, %s29, %s20
      %p31 = scmp.ge.s32.totalorder %s30, 1
      %s32 = scalar_select %p31, 0, %s30
      %s33 = ssub.s32 %s20, %s32
      %p34 = scmp.eq.s32.totalorder %s33, 0
      %s36 = sadd.s32 %s35, 1
      %s37 = scalar_select %p34, %s35, %s36
      %p40 = pneg %p34
      %p41 = scmp.eq.s32.totalorder %s13, 1
      %p42 = por %p40, %p41
      %p43 = scmp.ne.s32.totalorder %s35, %s38
      %p44 = scmp.eq.s32.totalorder %s13, 0
      %p45 = por %p43, %p44
      %p46 = scmp.ne.s32.totalorder %s35, %s38
      %p47 = scmp.eq.s32.totalorder %s18, 1
      %p48 = por %p46, %p47
      %p49 = scmp.ne.s32.totalorder %s38, %s39
      %p50 = scmp.eq.s32.totalorder %s18, 0
      %p51 = por %p49, %p50
      %p52 = scmp.ne.s32.totalorder %s38, %s39
      %p53 = scmp.eq.s32.totalorder %s19, 1
      %p54 = por %p52, %p53
      %p56 = scmp.ne.s32.totalorder %s39, %s55
      %p57 = scmp.eq.s32.totalorder %s19, 0
      %p58 = por %p56, %p57
      %s60 = sadd.s32 %s59, 1
      %p63 = scmp.eq.s32.totalorder %s13, 1
      %p64 = scmp.ne.s32.totalorder %s59, %s61
      %p65 = scmp.eq.s32.totalorder %s13, 0
      %p66 = por %p64, %p65
      %p67 = scmp.ne.s32.totalorder %s59, %s61
      %p68 = scmp.eq.s32.totalorder %s18, 1
      %p69 = por %p67, %p68
      %p70 = scmp.ne.s32.totalorder %s61, %s62
      %p71 = scmp.eq.s32.totalorder %s18, 0
      %p72 = por %p70, %p71
      %p73 = scmp.ne.s32.totalorder %s61, %s62
      %p74 = scmp.eq.s32.totalorder %s19, 1
      %p75 = por %p73, %p74
      %p77 = scmp.ne.s32.totalorder %s62, %s76
      %p78 = scmp.eq.s32.totalorder %s19, 0
      %p79 = por %p77, %p78
      %s81 = sadd.s32 %s80, 1
      %p84 = scmp.eq.s32.totalorder %s13, 1
      %p85 = scmp.ne.s32.totalorder %s80, %s82
      %p86 = scmp.eq.s32.totalorder %s13, 0
      %p87 = por %p85, %p86
      %p88 = scmp.ne.s32.totalorder %s80, %s82
      %p89 = scmp.eq.s32.totalorder %s18, 1
      %p90 = por %p88, %p89
      %p91 = scmp.ne.s32.totalorder %s82, %s83
      %p92 = scmp.eq.s32.totalorder %s18, 0
      %p93 = por %p91, %p92
      %p94 = scmp.ne.s32.totalorder %s82, %s83
      %p95 = scmp.eq.s32.totalorder %s19, 1
      %p96 = por %p94, %p95
      %p98 = scmp.ne.s32.totalorder %s83, %s97
      %p99 = scmp.eq.s32.totalorder %s19, 0
      %p100 = por %p98, %p99
      %s102 = sadd.s32 %s101, 1
      %p105 = scmp.eq.s32.totalorder %s13, 1
      %p106 = scmp.ne.s32.totalorder %s101, %s103
      %p107 = scmp.eq.s32.totalorder %s13, 0
      %p108 = por %p106, %p107
      %p109 = scmp.ne.s32.totalorder %s101, %s103
      %p110 = scmp.eq.s32.totalorder %s18, 1
      %p111 = por %p109, %p110
      %p112 = scmp.ne.s32.totalorder %s103, %s104
      %p113 = scmp.eq.s32.totalorder %s18, 0
      %p114 = por %p112, %p113
      %p115 = scmp.ne.s32.totalorder %s103, %s104
      %p116 = scmp.eq.s32.totalorder %s19, 1
      %p117 = por %p115, %p116
      %p119 = scmp.ne.s32.totalorder %s104, %s118
      %p120 = scmp.eq.s32.totalorder %s19, 0
      %p121 = por %p119, %p120
      %s122 = ssub.s32 %s21, %s28
      %s123 = ssub.s32 %s20, %s32
      %s124 = sor.u32 %s122, %s123
      %p125 = scmp.eq.s32.totalorder %s124, 0
      %s127 = sadd.s32 %s126, 1
      %s128 = scalar_select %p125, %s126, %s127
      %p131 = pneg %p125
      %p132 = scmp.eq.s32.totalorder %s13, 1
      %p133 = por %p131, %p132
      %p134 = scmp.ne.s32.totalorder %s126, %s129
      %p135 = scmp.eq.s32.totalorder %s13, 0
      %p136 = por %p134, %p135
      %p137 = scmp.ne.s32.totalorder %s126, %s129
      %p138 = scmp.eq.s32.totalorder %s18, 1
      %p139 = por %p137, %p138
      %p140 = scmp.ne.s32.totalorder %s129, %s130
      %p141 = scmp.eq.s32.totalorder %s18, 0
      %p142 = por %p140, %p141
      %p143 = scmp.ne.s32.totalorder %s129, %s130
      %p144 = scmp.eq.s32.totalorder %s19, 1
      %p145 = por %p143, %p144
      %p147 = scmp.ne.s32.totalorder %s130, %s146
      %p148 = scmp.eq.s32.totalorder %s19, 0
      %p149 = por %p147, %p148
      %p150 = scmp.le.s32.totalorder 1, %s13
      %p151 = scmp.lt.s32.totalorder %s13, 3
      %p152 = pnand %p150, %p151
      %p153 = pneg %p152
      // Predicated region
      $region9: #{tpu_custom_call.1} parent=5 // pred_check
        _
      $region10: #{tpu_custom_call.1} parent=5 // pred_check_branch
        %155 = sbr.rel (%p152) target = $region12
      $region11: #{tpu_custom_call.1} parent=5 // pred_region
        %s156 = ssub.s32 %s13, 1
        // Predicated region
        $region13: #{tpu_custom_call.1} parent=11 // pred_check
          %p157 = pneg %p51
        $region14: #{tpu_custom_call.1} parent=11 // pred_check_branch
          %159 = sbr.rel (%p157) target = $region16
        $region15: #{tpu_custom_call.1} parent=11 // pred_region
          %p160 = scmp.lt.s32.totalorder %s22, 0
          %s161 = scalar_select %p160, %s22, 0
          %s162 = smul.addr %s161, 2
          %s163 = scalar_lea.vmem %s0, %s162
        $region16: #{tpu_custom_call.1} parent=11 // pred_fallthru
          _
        // Predicated region
        $region17: #{tpu_custom_call.1} parent=11 // pred_check
          %p164 = pneg %p72
        $region18: #{tpu_custom_call.1} parent=11 // pred_check_branch
          %166 = sbr.rel (%p164) target = $region20
        $region19: #{tpu_custom_call.1} parent=11 // pred_region
          _
        $region20: #{tpu_custom_call.1} parent=11 // pred_fallthru
          _
        // Predicated region
        $region21: #{tpu_custom_call.1} parent=11 // pred_check
          %p167 = pneg %p93
        $region22: #{tpu_custom_call.1} parent=11 // pred_check_branch
          %169 = sbr.rel (%p167) target = $region24
        $region23: #{tpu_custom_call.1} parent=11 // pred_region
          _
        $region24: #{tpu_custom_call.1} parent=11 // pred_fallthru
          _
        // Predicated region
        $region25: #{tpu_custom_call.1} parent=11 // pred_check
          %p170 = pneg %p114
        $region26: #{tpu_custom_call.1} parent=11 // pred_check_branch
          %172 = sbr.rel (%p170) target = $region28
        $region27: #{tpu_custom_call.1} parent=11 // pred_region
          _
        $region28: #{tpu_custom_call.1} parent=11 // pred_fallthru
          _
      $region12: #{tpu_custom_call.1} parent=5 // pred_fallthru
        _
      %p173 = scmp.lt.s32.totalorder %s13, 2
      // Predicated region
      $region29: #{tpu_custom_call.1} parent=5 // pred_check
        %p174 = pneg %p173
      $region30: #{tpu_custom_call.1} parent=5 // pred_check_branch
        %176 = sbr.rel (%p174) target = $region32
      $region31: #{tpu_custom_call.1} parent=5 // pred_region
        _
      $region32: #{tpu_custom_call.1} parent=5 // pred_fallthru
        _
      %p177 = scmp.le.s32.totalorder 1, %s13
      %p178 = scmp.lt.s32.totalorder %s13, 3
      %p179 = pnand %p177, %p178
      %p180 = pneg %p179
      // Predicated region
      $region33: #{tpu_custom_call.1} parent=5 // pred_check
        _
      $region34: #{tpu_custom_call.1} parent=5 // pred_check_branch
        %182 = sbr.rel (%p179) target = $region36
      $region35: #{tpu_custom_call.1} parent=5 // pred_region
        %s183 = ssub.s32 %s13, 1
        %p184 = scmp.lt.s32.totalorder %s22, 0
        %s185 = scalar_select %p184, %s22, 0
        %s186 = smul.addr %s185, 2
        %s187 = scalar_lea.vmem %s0, %s186
        %p188 = pneg %p51
        %p189 = pneg %p48
        %p190 = pneg %p72
        %p191 = pneg %p69
        %p192 = pneg %p93
        %p193 = pneg %p90
        %p194 = pneg %p114
        %p195 = pneg %p111
        %p196 = pneg %p142
        %p197 = pneg %p139
        %s198 = sand.u32 %s129, 1
        %s199 = scalar_lea.sflag [#allocation4], %s198
        %s200 = sand.u32 %s129, 1
        %s201 = smul.addr %s200, 2
        %s202 = scalar_lea.vmem [#allocation3], %s201
        %p203 = scmp.lt.s32.totalorder %s22, 0
        %s204 = scalar_select %p203, %s22, 0
        %s205 = smul.addr %s204, 2
        %s206 = scalar_lea.vmem %s0, %s205
        %p207 = scmp.eq.s32.totalorder %s23, 0
        // Predicated region
        $region37: #{tpu_custom_call.1} parent=35 // pred_check
          %p208 = pneg %p207
        $region38: #{tpu_custom_call.1} parent=35 // pred_check_branch
          %210 = sbr.rel (%p208) target = $region40
        $region39: #{tpu_custom_call.1} parent=35 // pred_region
          %v211 = vld [vmem:[%s206] sm:$0x3]
          %213 = vset.pattern.permute.xlu0 0
          %214 = vperm.xlu0 %213, %v211
          %v215 = vpop.permute.xlu0 %214
          %v217 = vld [vmem:[%s1] sm:$0x1]
          %v219 = vlaneseq
          %v220 = vshrl.u32 %v219, 7
          %v221 = vsub.s32 0, %v220
          %v222 = vrot.slane %v217, %v221
          %v224 = vadd.f32 %v215, %v222
          %v225 = vld [vmem:[%s2] sm:$0x1]
          %v227 = vlaneseq
          %v228 = vshrl.u32 %v227, 7
          %v229 = vsub.s32 0, %v228
          %v230 = vrot.slane %v225, %v229
          %v232 = vmul.f32 %v224, %v230
          %v233 = vld [vmem:[%s3] sm:$0x1]
          %v235 = vlaneseq
          %v236 = vshrl.u32 %v235, 7
          %v237 = vsub.s32 0, %v236
          %v238 = vrot.slane %v233, %v237
          %vm240 = vcmp.ne.f32.partialorder %v238, 0.0
          %v241 = vand.u32 2147483647, %v232
          %vm242 = vcmp.le.f32.partialorder %v241, 0.7853982
          %vm243 = vcmp.lt.s32.totalorder %v232, 0
          %v244 = vand.u32 %v232, 2139095040
          %v245 = vshrl.u32 %v244, 23
          %v246 = vsub.s32 %v245, 127
          %v247 = vand.u32 2147483647, %v232
          %v248 = vand.u32 %v247, 8388607
          %v249 = vor.u32 %v248, 8388608
          %v250 = vsub.s32 0, %v249
          %v251 = vadd.s32 %v246, 1
          %vm252 = vcmp.gt.s32.totalorder %v251, 0
          %v253 = vsel %vm252, %v251, 0
          %v254 = vshrl.u32 %v253, 5
          %v255 = vand.u32 %v253, 31
          %v256 = vsub.s32 32, %v255
          %v257 = vshrl.u32 683565275, %v256
          %v258 = vshll.u32 683565275, %v255
          %v259 = vshrl.u32 2475754826, %v256
          %v260 = vor.u32 %v258, %v259
          %v261 = vshll.u32 2475754826, %v255
          %v262 = vshrl.u32 2131351028, %v256
          %v263 = vor.u32 %v261, %v262
          %v264 = vshll.u32 2131351028, %v255
          %v265 = vshrl.u32 2102212464, %v256
          %v266 = vor.u32 %v264, %v265
          %v267 = vshll.u32 2102212464, %v255
          %v268 = vshrl.u32 920167782, %v256
          %v269 = vor.u32 %v267, %v268
          %v270 = vshll.u32 920167782, %v255
          %v271 = vshrl.u32 1326507024, %v256
          %v272 = vor.u32 %v270, %v271
          %vm273 = vcmp.lt.s32.totalorder %v254, 1
          %vm274 = vcmp.lt.s32.totalorder %v254, 2
          %vm275 = vcmp.lt.s32.totalorder %v254, 3
          %vm276 = vcmp.lt.s32.totalorder %v254, 4
          %v277 = vsel %vm273, %v257, %v260
          %v278 = vsel %vm276, %v266, 2102212464
          %v279 = vsel %vm275, %v263, %v278
          %v280 = vsel %vm274, %v277, %v279
          %v281 = vsel %vm273, %v260, %v263
          %v282 = vsel %vm276, %v269, 920167782
          %v283 = vsel %vm275, %v266, %v282
          %v284 = vsel %vm274, %v281, %v283
          %v285 = vsel %vm273, %v263, %v266
          %v286 = vsel %vm276, %v272, 1326507024
          %v287 = vsel %vm275, %v269, %v286
          %v288 = vsel %vm274, %v285, %v287
          %v289 = vshll.u32 %v249, 8
          %v290 = vmul.u32.u64.compose %v289, %v288
          %v291 = vextract.low.u32 %v290
          %v292 = vextract.high.u32 %v290
          %v293 = vmul.u32.u64.compose %v289, %v284
          %v294 = vextract.low.u32 %v293
          %v295 = vextract.high.u32 %v293
          %v296 = vmul.u32 %v289, %v280
          %v297 = vadd.s32 %v292, %v294
          %vm298 = vc.u32 %v292, %v294
          %v299 = vadd.s32 %v295, 1
          %v300 = vsel %vm298, %v299, %v295
          %v301 = vadd.s32 %v296, %v300
          %v302 = vadd.s32 %v301, 536870912
          %v303 = vshrl.u32 %v302, 30
          %v304 = vshll.u32 %v303, 30
          %v305 = vsub.s32 %v301, %v304
          %vm306 = vcmp.lt.s32.totalorder %v305, 0
          %v307 = vsub.s32 0, %v305
          %v308 = vsel %vm306, %v307, %v305
          %v309 = vclz %v308
          %v310 = vsub.s32 %v309, 2
          %vm311 = vcmp.gt.s32.totalorder 0, %v310
          %v312 = vsel %vm311, 0, %v310
          %v313 = vsub.s32 32, %v312
          %v314 = vshll.u32 %v305, %v312
          %v315 = vshrl.u32 %v297, %v313
          %v316 = vor.u32 %v314, %v315
          %v317 = vsub.s32 4294967266, %v312
          %v318 = vadd.s32 %v317, 127
          %v319 = vshll.u32 %v318, 23
          %v320 = vor.u32 4788187, %v319
          %v321 = vand.u32 2147483647, %v320
          %v323 = vcvt.s32.f32 %v316
          %v324 = vmul.f32 %v323, %v321
          %v325 = vxor.u32 %v324, 2147483648
          %v326 = vsel %vm243, %v325, %v324
          %v327 = vsub.s32 4, %v303
          %v328 = vsel %vm243, %v327, %v303
          %v329 = vsel %vm242, %v232, %v326
          %v330 = vsel %vm242, 0, %v328
          %v331 = vcosq.f32.pop %v329
          %v332 = vsinq.f32.pop %v329
          %vm333 = vweird.f32 %v232
          %v334 = vand.u32 %v330, 3
          %vm335 = vcmp.lt.s32.totalorder %v334, 2
          %vm336 = vcmp.eq.s32.totalorder %v334, 0
          %v337 = vxor.u32 %v332, 2147483648
          %v338 = vsel %vm336, %v331, %v337
          %vm339 = vcmp.eq.s32.totalorder %v334, 2
          %v340 = vxor.u32 %v331, 2147483648
          %v341 = vsel %vm339, %v340, %v332
          %v342 = vsel %vm335, %v338, %v341
          %v343 = vsel %vm333, nan, %v342
          %v344 = vand.u32 2147483647, %v232
          %vm345 = vcmp.le.f32.partialorder %v344, 0.7853982
          %vm346 = vcmp.lt.s32.totalorder %v232, 0
          %v347 = vand.u32 %v232, 2139095040
          %v348 = vshrl.u32 %v347, 23
          %v349 = vsub.s32 %v348, 127
          %v350 = vand.u32 2147483647, %v232
          %v351 = vand.u32 %v350, 8388607
          %v352 = vor.u32 %v351, 8388608
          %v353 = vsub.s32 0, %v352
          %v354 = vadd.s32 %v349, 1
          %vm355 = vcmp.gt.s32.totalorder %v354, 0
          %v356 = vsel %vm355, %v354, 0
          %v357 = vshrl.u32 %v356, 5
          %v358 = vand.u32 %v356, 31
          %v359 = vsub.s32 32, %v358
          %v360 = vshrl.u32 683565275, %v359
          %v361 = vshll.u32 683565275, %v358
          %v362 = vshrl.u32 2475754826, %v359
          %v363 = vor.u32 %v361, %v362
          %v364 = vshll.u32 2475754826, %v358
          %v365 = vshrl.u32 2131351028, %v359
          %v366 = vor.u32 %v364, %v365
          %v367 = vshll.u32 2131351028, %v358
          %v368 = vshrl.u32 2102212464, %v359
          %v369 = vor.u32 %v367, %v368
          %v370 = vshll.u32 2102212464, %v358
          %v371 = vshrl.u32 920167782, %v359
          %v372 = vor.u32 %v370, %v371
          %v373 = vshll.u32 920167782, %v358
          %v374 = vshrl.u32 1326507024, %v359
          %v375 = vor.u32 %v373, %v374
          %vm376 = vcmp.lt.s32.totalorder %v357, 1
          %vm377 = vcmp.lt.s32.totalorder %v357, 2
          %vm378 = vcmp.lt.s32.totalorder %v357, 3
          %vm379 = vcmp.lt.s32.totalorder %v357, 4
          %v380 = vsel %vm376, %v360, %v363
          %v381 = vsel %vm379, %v369, 2102212464
          %v382 = vsel %vm378, %v366, %v381
          %v383 = vsel %vm377, %v380, %v382
          %v384 = vsel %vm376, %v363, %v366
          %v385 = vsel %vm379, %v372, 920167782
          %v386 = vsel %vm378, %v369, %v385
          %v387 = vsel %vm377, %v384, %v386
          %v388 = vsel %vm376, %v366, %v369
          %v389 = vsel %vm379, %v375, 1326507024
          %v390 = vsel %vm378, %v372, %v389
          %v391 = vsel %vm377, %v388, %v390
          %v392 = vshll.u32 %v352, 8
          %v393 = vmul.u32.u64.compose %v392, %v391
          %v394 = vextract.low.u32 %v393
          %v395 = vextract.high.u32 %v393
          %v396 = vmul.u32.u64.compose %v392, %v387
          %v397 = vextract.low.u32 %v396
          %v398 = vextract.high.u32 %v396
          %v399 = vmul.u32 %v392, %v383
          %v400 = vadd.s32 %v395, %v397
          %vm401 = vc.u32 %v395, %v397
          %v402 = vadd.s32 %v398, 1
          %v403 = vsel %vm401, %v402, %v398
          %v404 = vadd.s32 %v399, %v403
          %v405 = vadd.s32 %v404, 536870912
          %v406 = vshrl.u32 %v405, 30
          %v407 = vshll.u32 %v406, 30
          %v408 = vsub.s32 %v404, %v407
          %vm409 = vcmp.lt.s32.totalorder %v408, 0
          %v410 = vsub.s32 0, %v408
          %v411 = vsel %vm409, %v410, %v408
          %v412 = vclz %v411
          %v413 = vsub.s32 %v412, 2
          %vm414 = vcmp.gt.s32.totalorder 0, %v413
          %v415 = vsel %vm414, 0, %v413
          %v416 = vsub.s32 32, %v415
          %v417 = vshll.u32 %v408, %v415
          %v418 = vshrl.u32 %v400, %v416
          %v419 = vor.u32 %v417, %v418
          %v420 = vsub.s32 4294967266, %v415
          %v421 = vadd.s32 %v420, 127
          %v422 = vshll.u32 %v421, 23
          %v423 = vor.u32 4788187, %v422
          %v424 = vand.u32 2147483647, %v423
          %v426 = vcvt.s32.f32 %v419
          %v427 = vmul.f32 %v426, %v424
          %v428 = vxor.u32 %v427, 2147483648
          %v429 = vsel %vm346, %v428, %v427
          %v430 = vsub.s32 4, %v406
          %v431 = vsel %vm346, %v430, %v406
          %v432 = vsel %vm345, %v232, %v429
          %v433 = vsel %vm345, 0, %v431
          %v434 = vcosq.f32.pop %v432
          %v435 = vsinq.f32.pop %v432
          %vm436 = vweird.f32 %v232
          %v437 = vadd.s32 %v433, 3
          %v438 = vand.u32 %v437, 3
          %vm439 = vcmp.lt.s32.totalorder %v438, 2
          %vm440 = vcmp.eq.s32.totalorder %v438, 0
          %v441 = vxor.u32 %v435, 2147483648
          %v442 = vsel %vm440, %v434, %v441
          %vm443 = vcmp.eq.s32.totalorder %v438, 2
          %v444 = vxor.u32 %v434, 2147483648
          %v445 = vsel %vm443, %v444, %v435
          %v446 = vsel %vm439, %v442, %v445
          %v447 = vsel %vm436, nan, %v446
          %v448 = vsel %vm240, %v343, %v447
          %449 = vst [vmem:[#allocation2] sm:$0x3] %v448
        $region40: #{tpu_custom_call.1} parent=35 // pred_fallthru
          _
        %v450 = vld [vmem:[#allocation2] sm:$0x3]
        %451 = vst [vmem:[%s202] sm:$0x3] %v450
        %s452 = sand.u32 %s129, 1
        %s453 = scalar_lea.sflag [#allocation4], %s452
        %s454 = sand.u32 %s129, 1
        %s455 = smul.addr %s454, 2
        %s456 = scalar_lea.vmem [#allocation3], %s455
        // Predicated region
        $region41: #{tpu_custom_call.1} parent=35 // pred_check
          %p457 = pneg %p139
        $region42: #{tpu_custom_call.1} parent=35 // pred_check_branch
          %459 = sbr.rel (%p457) target = $region44
        $region43: #{tpu_custom_call.1} parent=35 // pred_region
          %s461 = ssub.s32 32, 32
          %462 = vsyncadd %s453, %s461
          %s463 = sadd.s32 %s22, %s23
          %s464 = smul.addr %s463, 32
          %s465 = scalar_lea.hbm %s4, %s464
          %s467 = sshll.u32 %s456, 4
          %s468 = int_to_ptr.vmem [resolvable:$true] %s467
          %470 = dma.vmem_to_hbm [thread:$0]  %s468, 32, %s465, %s453
        $region44: #{tpu_custom_call.1} parent=35 // pred_fallthru
          _
      $region36: #{tpu_custom_call.1} parent=5 // pred_fallthru
        _
      %p471 = scmp.le.s32.totalorder 2, %s13
      // Predicated region
      $region45: #{tpu_custom_call.1} parent=5 // pred_check
        %p472 = pneg %p471
      $region46: #{tpu_custom_call.1} parent=5 // pred_check_branch
        %474 = sbr.rel (%p472) target = $region48
      $region47: #{tpu_custom_call.1} parent=5 // pred_region
        %s475 = ssub.s32 %s13, 2
        // Predicated region
        $region49: #{tpu_custom_call.1} parent=47 // pred_check
          %p476 = pneg %p145
        $region50: #{tpu_custom_call.1} parent=47 // pred_check_branch
          %478 = sbr.rel (%p476) target = $region52
        $region51: #{tpu_custom_call.1} parent=47 // pred_region
          %s479 = sand.u32 %s130, 1
          %s480 = scalar_lea.sflag [#allocation4], %s479
          %s481 = sand.u32 %s130, 1
          %s482 = smul.addr %s481, 2
          %s483 = scalar_lea.vmem [#allocation3], %s482
          %484 = dma.done %s480, 32
        $region52: #{tpu_custom_call.1} parent=47 // pred_fallthru
          _
      $region48: #{tpu_custom_call.1} parent=5 // pred_fallthru
        _
    $region6: #{tpu_custom_call.1} parent=1 // loop_footer
      %s17 = sadd.s32 1, %s13
    $region7: #{tpu_custom_call.1} parent=1 // loop_footer_branch
      %12 = sbr.rel target = $region3
    $region8: #{tpu_custom_call.1} parent=1 // loop_exit
      _
    %485 = vsyncpa [#allocation4], 1
    %s486 = scalar_lea.sflag [#allocation4], 1
    %487 = vsyncpa %s486, 1

</llo_original>
